<compile_context>
chip_gen: v6e
topology: v6e:2x2x1
jax: 0.10.0
libtpu: 0.0.40
codegen_flags: <defaults>
</compile_context>

<pallas_src>
import jax
import jax.numpy as jnp
from jax.experimental import pallas as pl
from jax.experimental.pallas import tpu as pltpu

STATE_SHAPE = 3
ACTION_SHAPE = 1
HIDDEN1 = 400
HIDDEN2 = 300
HIDDEN1_PAD = 512      # next multiple of 128
HIDDEN2_PAD = 384      # next multiple of 128
ACTION_LOW = -2.0
ACTION_HIGH = 2.0
UPPER_BOUND = 2.0
OUT_LANES = 128        # lane-dense output slab width
BATCH_TILE = 128       # batch rows per grid step


def _round_up(n, m):
    return ((n + m - 1) // m) * m


def actor_kernel(scalars_ref, x_ref, w1_ref, b1_ref, w2_ref, b2_ref, w3_ref,
                 out_ref):
    # scalars_ref: SMEM (2,) f32 = [b3, noise]
    x = x_ref[...]                       # [tb, 3]   f32
    w1 = w1_ref[...]                     # [8, 512]  f32 (rows 3..7 are zero)

    # ---- Layer 1: K=3 is too small for the MXU -> 3 broadcast FMAs on VPU.
    h1 = (x[:, 0:1] * w1[0:1, :]
          + x[:, 1:2] * w1[1:2, :]
          + x[:, 2:3] * w1[2:3, :]
          + b1_ref[...])                 # [tb, 512]
    h1 = jnp.maximum(h1, 0.0)            # padded cols stay exactly 0

    # ---- Layer 2: the only real matmul -> MXU, f32 accumulate.
    #      (w2 may be bf16; cast h1 to match, accumulate in f32.)
    h2 = jnp.dot(h1.astype(w2_ref.dtype), w2_ref[...],
                 preferred_element_type=jnp.float32) + b2_ref[...]
    h2 = jnp.maximum(h2, 0.0)            # [tb, 384]

    # ---- Layer 3: N=1 -> VPU multiply + cross-lane reduction (MXU stays free).
    b3 = scalars_ref[0]
    noise = scalars_ref[1]
    h3 = jnp.sum(h2 * w3_ref[...], axis=-1, keepdims=True) + b3   # [tb, 1]

    a = jnp.tanh(h3)
    # NOTE: the PyTorch module clamps tanh(.)+noise to [-2, 2] *before* scaling
    # by upper_bound (kept as-is to match the reference semantics).
    a = jnp.clip(a + noise, ACTION_LOW, ACTION_HIGH)
    out = UPPER_BOUND * a                # [tb, 1]

    # Lane-dense store: broadcast the action across the 128-lane output slab.
    out_ref[...] = jnp.broadcast_to(out, out_ref.shape)


@jax.jit
def actor_forward(state, packed, noise):
    """state: [B, 3] f32; packed: dict from pack_params(); noise: 0-d f32."""
    # TODO(synk): for per-env-step RL loops (B~1) fuse actor + env consumer into
    # one pallas_call / jitted loop so weights are not re-fetched every step.
    B = state.shape[0]
    tb = min(BATCH_TILE, _round_up(B, 8))
    b_pad = _round_up(B, tb)
    if b_pad != B:
        state = jnp.pad(state, ((0, b_pad - B), (0, 0)))
    grid = (b_pad // tb,)

    # b3 + the single exploration-noise draw live in SMEM via scalar prefetch.
    scalars = jnp.stack([packed["b3"], noise]).astype(jnp.float32)

    grid_spec = pltpu.PrefetchScalarGridSpec(
        num_scalar_prefetch=1,
        grid=grid,
        in_specs=[
            pl.BlockSpec((tb, STATE_SHAPE), lambda i, s: (i, 0)),            # state
            pl.BlockSpec((8, HIDDEN1_PAD), lambda i, s: (0, 0)),             # w1
            pl.BlockSpec((1, HIDDEN1_PAD), lambda i, s: (0, 0)),             # b1
            pl.BlockSpec((HIDDEN1_PAD, HIDDEN2_PAD), lambda i, s: (0, 0)),   # w2
            pl.BlockSpec((1, HIDDEN2_PAD), lambda i, s: (0, 0)),             # b2
            pl.BlockSpec((1, HIDDEN2_PAD), lambda i, s: (0, 0)),             # w3 row
        ],
        out_specs=pl.BlockSpec((tb, OUT_LANES), lambda i, s: (i, 0)),
    )

    out = pl.pallas_call(
        actor_kernel,
        out_shape=jax.ShapeDtypeStruct((b_pad, OUT_LANES), jnp.float32),
        grid_spec=grid_spec,
        compiler_params=pltpu.CompilerParams(
            dimension_semantics=("parallel",)),   # v7x: split batch over 2 TCs
    )(scalars, state,
      packed["w1"], packed["b1"], packed["w2"], packed["b2"], packed["w3"])

    return out[:B, :ACTION_SHAPE]


def init_params(key):
    """nn.Linear-style init (U[-1/sqrt(fan_in), 1/sqrt(fan_in)]), logical sizes."""
    ks = jax.random.split(key, 6)

    def linear(kw, kb, fan_in, fan_out):
        bound = 1.0 / jnp.sqrt(float(fan_in))
        w = jax.random.uniform(kw, (fan_in, fan_out), jnp.float32, -bound, bound)
        b = jax.random.uniform(kb, (1, fan_out), jnp.float32, -bound, bound)
        return w, b

    w1, b1 = linear(ks[0], ks[1], STATE_SHAPE, HIDDEN1)
    w2, b2 = linear(ks[2], ks[3], HIDDEN1, HIDDEN2)
    w3, b3 = linear(ks[4], ks[5], HIDDEN2, ACTION_SHAPE)
    return {"w1": w1, "b1": b1, "w2": w2, "b2": b2, "w3": w3, "b3": b3}


def pack_params(params, w2_dtype=jnp.bfloat16):
    """One-time repack: zero-pad hidden dims to lane multiples, [in,out] layout,
    w3 as a row vector, w2 (the 480 KB tensor) optionally stored in bf16."""
    w1 = jnp.zeros((8, HIDDEN1_PAD), jnp.float32
                   ).at[:STATE_SHAPE, :HIDDEN1].set(params["w1"])
    b1 = jnp.zeros((1, HIDDEN1_PAD), jnp.float32).at[:, :HIDDEN1].set(params["b1"])
    w2 = jnp.zeros((HIDDEN1_PAD, HIDDEN2_PAD), jnp.float32
                   ).at[:HIDDEN1, :HIDDEN2].set(params["w2"]).astype(w2_dtype)
    b2 = jnp.zeros((1, HIDDEN2_PAD), jnp.float32).at[:, :HIDDEN2].set(params["b2"])
    w3 = jnp.zeros((1, HIDDEN2_PAD), jnp.float32).at[:, :HIDDEN2].set(params["w3"].T)
    b3 = params["b3"].reshape(())
    return {"w1": w1, "b1": b1, "w2": w2, "b2": b2, "w3": w3, "b3": b3}


def actor_reference(state, params, noise):
    """Pure-JAX, PyTorch-faithful math (plain f32 matmuls at logical sizes)."""
    h1 = jnp.maximum(state @ params["w1"] + params["b1"], 0.0)
    h2 = jnp.maximum(h1 @ params["w2"] + params["b2"], 0.0)
    a = jnp.tanh(h2 @ params["w3"] + params["b3"])
    return UPPER_BOUND * jnp.clip(a + noise, ACTION_LOW, ACTION_HIGH)


if __name__ == "__main__":
    key = jax.random.PRNGKey(0)
    k_params, k_state, k_noise, k_state2 = jax.random.split(key, 4)

    params = init_params(k_params)
    packed_f32 = pack_params(params, w2_dtype=jnp.float32)     # bit-faithful weights
    packed_bf16 = pack_params(params, w2_dtype=jnp.bfloat16)   # recommended on v5e/v6e

    # single 0-d noise draw, std=3.0 (matches torch.normal(0.0, tensor(3.0)))
    noise = (3.0 * jax.random.normal(k_noise, ())).astype(jnp.float32)

    # --- small batch (B=2), f32 weights: check vs the plain-matmul reference
    state = jax.random.normal(k_state, (2, STATE_SHAPE), jnp.float32)
    out_f32 = jax.block_until_ready(actor_forward(state, packed_f32, noise))
    ref = actor_reference(state, params, noise)
    assert out_f32.shape == (2, ACTION_SHAPE)
    assert jnp.allclose(out_f32, ref, atol=1e-2), (out_f32, ref)

    # --- bf16 w2 path (halves the dominant weight DMA); slightly looser tol
    out_bf16 = jax.block_until_ready(actor_forward(state, packed_bf16, noise))
    assert jnp.allclose(out_bf16, ref, atol=3e-2), (out_bf16, ref)

    # --- larger batch exercising the batch grid (2 tiles of 128) + padding
    state_big = jax.random.normal(k_state2, (200, STATE_SHAPE), jnp.float32)
    out_big = jax.block_until_ready(actor_forward(state_big, packed_bf16, noise))
    ref_big = actor_reference(state_big, params, noise)
    assert out_big.shape == (200, ACTION_SHAPE)
    assert jnp.allclose(out_big, ref_big, atol=3e-2), (out_big, ref_big)

    print("KERNEL_OK")
</pallas_src>

<mosaic_0001>
module attributes {stable_mosaic.version = 11 : i64} {
  func.func @actor_kernel(%arg0: i32, %arg1: memref<2xf32, #tpu.memory_space<smem>>, %arg2: memref<8x3xf32, #tpu.memory_space<vmem>>, %arg3: memref<8x512xf32, #tpu.memory_space<vmem>>, %arg4: memref<1x512xf32, #tpu.memory_space<vmem>>, %arg5: memref<512x384xf32, #tpu.memory_space<vmem>>, %arg6: memref<1x384xf32, #tpu.memory_space<vmem>>, %arg7: memref<1x384xf32, #tpu.memory_space<vmem>>, %arg8: memref<8x128xf32, #tpu.memory_space<vmem>>) attributes {dimension_semantics = [#tpu.dimension_semantics<parallel>], iteration_bounds = array<i64: 1>, scalar_prefetch = 1 : i64, scratch_operands = 0 : i64, tpu.core_type = #tpu.core_type<tc>, window_params = [{transform_indices = @transform_0, window_bounds = array<i64: 8, 3>}, {pipeline_mode = #tpu.pipeline_mode<synchronous>, transform_indices = @transform_1, window_bounds = array<i64: 8, 512>}, {pipeline_mode = #tpu.pipeline_mode<synchronous>, transform_indices = @transform_2, window_bounds = array<i64: 1, 512>}, {pipeline_mode = #tpu.pipeline_mode<synchronous>, transform_indices = @transform_3, window_bounds = array<i64: 512, 384>}, {pipeline_mode = #tpu.pipeline_mode<synchronous>, transform_indices = @transform_4, window_bounds = array<i64: 1, 384>}, {pipeline_mode = #tpu.pipeline_mode<synchronous>, transform_indices = @transform_5, window_bounds = array<i64: 1, 384>}, {transform_indices = @transform_6, window_bounds = array<i64: 8, 128>}]} {
    %c0 = arith.constant 0 : index
    %c0_0 = arith.constant 0 : index
    %0 = vector.load %arg2[%c0, %c0_0] : memref<8x3xf32, #tpu.memory_space<vmem>>, vector<8x3xf32>
    %c0_1 = arith.constant 0 : index
    %c0_2 = arith.constant 0 : index
    %1 = vector.load %arg3[%c0_1, %c0_2] : memref<8x512xf32, #tpu.memory_space<vmem>>, vector<8x512xf32>
    %2 = vector.extract_strided_slice %0 {offsets = [0, 0], sizes = [8, 1], strides = [1, 1]} : vector<8x3xf32> to vector<8x1xf32>
    %3 = vector.extract_strided_slice %1 {offsets = [0, 0], sizes = [1, 512], strides = [1, 1]} : vector<8x512xf32> to vector<1x512xf32>
    %4 = vector.broadcast %2 : vector<8x1xf32> to vector<8x512xf32>
    %5 = vector.broadcast %3 : vector<1x512xf32> to vector<8x512xf32>
    %6 = arith.mulf %4, %5 : vector<8x512xf32>
    %7 = vector.extract_strided_slice %0 {offsets = [0, 1], sizes = [8, 1], strides = [1, 1]} : vector<8x3xf32> to vector<8x1xf32>
    %8 = vector.extract_strided_slice %1 {offsets = [1, 0], sizes = [1, 512], strides = [1, 1]} : vector<8x512xf32> to vector<1x512xf32>
    %9 = vector.broadcast %7 : vector<8x1xf32> to vector<8x512xf32>
    %10 = vector.broadcast %8 : vector<1x512xf32> to vector<8x512xf32>
    %11 = arith.mulf %9, %10 : vector<8x512xf32>
    %12 = arith.addf %6, %11 : vector<8x512xf32>
    %13 = vector.extract_strided_slice %0 {offsets = [0, 2], sizes = [8, 1], strides = [1, 1]} : vector<8x3xf32> to vector<8x1xf32>
    %14 = vector.extract_strided_slice %1 {offsets = [2, 0], sizes = [1, 512], strides = [1, 1]} : vector<8x512xf32> to vector<1x512xf32>
    %15 = vector.broadcast %13 : vector<8x1xf32> to vector<8x512xf32>
    %16 = vector.broadcast %14 : vector<1x512xf32> to vector<8x512xf32>
    %17 = arith.mulf %15, %16 : vector<8x512xf32>
    %18 = arith.addf %12, %17 : vector<8x512xf32>
    %c0_3 = arith.constant 0 : index
    %c0_4 = arith.constant 0 : index
    %19 = vector.load %arg4[%c0_3, %c0_4] : memref<1x512xf32, #tpu.memory_space<vmem>>, vector<1x512xf32>
    %20 = vector.broadcast %19 : vector<1x512xf32> to vector<8x512xf32>
    %21 = arith.addf %18, %20 : vector<8x512xf32>
    %cst = arith.constant 0.000000e+00 : f32
    %22 = vector.broadcast %cst : f32 to vector<8x512xf32>
    %23 = arith.maximumf %21, %22 : vector<8x512xf32>
    %c0_5 = arith.constant 0 : index
    %c0_6 = arith.constant 0 : index
    %24 = vector.load %arg5[%c0_5, %c0_6] : memref<512x384xf32, #tpu.memory_space<vmem>>, vector<512x384xf32>
    %cst_7 = arith.constant dense<0.000000e+00> : vector<8x384xf32>
    %25 = tpu.matmul %23, %24, %cst_7 {dimension_numbers = #tpu.dot_dimension_numbers<[1], [0], [0], [1], [0, 0, 1, 1], [], []>} : vector<8x512xf32>, vector<512x384xf32>, vector<8x384xf32> -> vector<8x384xf32>
    %c0_8 = arith.constant 0 : index
    %c0_9 = arith.constant 0 : index
    %26 = vector.load %arg6[%c0_8, %c0_9] : memref<1x384xf32, #tpu.memory_space<vmem>>, vector<1x384xf32>
    %27 = vector.broadcast %26 : vector<1x384xf32> to vector<8x384xf32>
    %28 = arith.addf %25, %27 : vector<8x384xf32>
    %cst_10 = arith.constant 0.000000e+00 : f32
    %29 = vector.broadcast %cst_10 : f32 to vector<8x384xf32>
    %30 = arith.maximumf %28, %29 : vector<8x384xf32>
    %c0_11 = arith.constant 0 : index
    %31 = memref.load %arg1[%c0_11] : memref<2xf32, #tpu.memory_space<smem>>
    %c1 = arith.constant 1 : index
    %32 = memref.load %arg1[%c1] : memref<2xf32, #tpu.memory_space<smem>>
    %c0_12 = arith.constant 0 : index
    %c0_13 = arith.constant 0 : index
    %33 = vector.load %arg7[%c0_12, %c0_13] : memref<1x384xf32, #tpu.memory_space<vmem>>, vector<1x384xf32>
    %34 = vector.broadcast %33 : vector<1x384xf32> to vector<8x384xf32>
    %35 = arith.mulf %30, %34 : vector<8x384xf32>
    %cst_14 = arith.constant dense<0.000000e+00> : vector<8xf32>
    %36 = vector.multi_reduction <add>, %35, %cst_14 [1] : vector<8x384xf32> to vector<8xf32>
    %37 = vector.shape_cast %36 : vector<8xf32> to vector<8x1xf32>
    %38 = vector.broadcast %31 : f32 to vector<8x1xf32>
    %39 = arith.addf %37, %38 : vector<8x1xf32>
    %40 = math.tanh %39 : vector<8x1xf32>
    %41 = vector.broadcast %32 : f32 to vector<8x1xf32>
    %42 = arith.addf %40, %41 : vector<8x1xf32>
    %cst_15 = arith.constant -2.000000e+00 : f32
    %cst_16 = arith.constant 2.000000e+00 : f32
    %43 = vector.broadcast %cst_15 : f32 to vector<8x1xf32>
    %44 = arith.maximumf %43, %42 : vector<8x1xf32>
    %45 = vector.broadcast %cst_16 : f32 to vector<8x1xf32>
    %46 = arith.minimumf %45, %44 : vector<8x1xf32>
    %cst_17 = arith.constant 2.000000e+00 : f32
    %47 = vector.broadcast %cst_17 : f32 to vector<8x1xf32>
    %48 = arith.mulf %47, %46 : vector<8x1xf32>
    %49 = vector.shape_cast %48 : vector<8x1xf32> to vector<8x1xf32>
    %50 = vector.broadcast %49 : vector<8x1xf32> to vector<8x128xf32>
    %c0_18 = arith.constant 0 : index
    %c0_19 = arith.constant 0 : index
    %51 = vector.load %arg8[%c0_18, %c0_19] : memref<8x128xf32, #tpu.memory_space<vmem>>, vector<8x128xf32>
    tpu.vector_store %arg8[%c0_18, %c0_19], %50 {strides = array<i32>} : memref<8x128xf32, #tpu.memory_space<vmem>>, vector<8x128xf32>,
    return
  }
  func.func @transform_0(%arg0: i32, %arg1: memref<2xf32, #tpu.memory_space<smem>>) -> (i32, i32) {
    %c0_i32 = arith.constant 0 : i32
    %c0_i32_0 = arith.constant 0 : i32
    return %arg0, %c0_i32 : i32, i32
  }
  func.func @transform_1(%arg0: i32, %arg1: memref<2xf32, #tpu.memory_space<smem>>) -> (i32, i32) {
    %c0_i32 = arith.constant 0 : i32
    %c0_i32_0 = arith.constant 0 : i32
    %c0_i32_1 = arith.constant 0 : i32
    return %c0_i32, %c0_i32_0 : i32, i32
  }
  func.func @transform_2(%arg0: i32, %arg1: memref<2xf32, #tpu.memory_space<smem>>) -> (i32, i32) {
    %c0_i32 = arith.constant 0 : i32
    %c0_i32_0 = arith.constant 0 : i32
    %c0_i32_1 = arith.constant 0 : i32
    return %c0_i32, %c0_i32_0 : i32, i32
  }
  func.func @transform_3(%arg0: i32, %arg1: memref<2xf32, #tpu.memory_space<smem>>) -> (i32, i32) {
    %c0_i32 = arith.constant 0 : i32
    %c0_i32_0 = arith.constant 0 : i32
    %c0_i32_1 = arith.constant 0 : i32
    return %c0_i32, %c0_i32_0 : i32, i32
  }
  func.func @transform_4(%arg0: i32, %arg1: memref<2xf32, #tpu.memory_space<smem>>) -> (i32, i32) {
    %c0_i32 = arith.constant 0 : i32
    %c0_i32_0 = arith.constant 0 : i32
    %c0_i32_1 = arith.constant 0 : i32
    return %c0_i32, %c0_i32_0 : i32, i32
  }
  func.func @transform_5(%arg0: i32, %arg1: memref<2xf32, #tpu.memory_space<smem>>) -> (i32, i32) {
    %c0_i32 = arith.constant 0 : i32
    %c0_i32_0 = arith.constant 0 : i32
    %c0_i32_1 = arith.constant 0 : i32
    return %c0_i32, %c0_i32_0 : i32, i32
  }
  func.func @transform_6(%arg0: i32, %arg1: memref<2xf32, #tpu.memory_space<smem>>) -> (i32, i32) {
    %c0_i32 = arith.constant 0 : i32
    %c0_i32_0 = arith.constant 0 : i32
    return %arg0, %c0_i32 : i32, i32
  }
}

</mosaic_0001>

<llo_original>
// kernel: actor_forward.1
$region0: #{actor_forward.1}
  #allocation0 [shape = 'u32[]', space=smem, size = 0x4, offset = 0x4, fixed_abs, tag = 'smem constant byte address 0x4 - core index']
  #allocation1 [shape = 'u32[144,128]{1,0:T(1,128)}', space=vmem, size = 0x12000, scoped, tag = 'internal scratch']
  #allocation2 [shape = 's32[1]{0}', space=sflag, size = 0x4, scoped, tag = 'scoped memory for actor_forward.1']
  #allocation3 [shape = 'u8[512]{0}', space=smem, size = 0x200, scoped, tag = 'prefetched SMEM operand 0']
  %s0 = inlined_call_operand.vmem [shape: f32[2], index: 0, kind: input, shape index: {}]
  %s1 = inlined_call_operand.vmem [shape: f32[8,3], index: 1, kind: input, shape index: {}]
  %s2 = inlined_call_operand.hbm [shape: f32[8,512], index: 2, kind: input, shape index: {}]
  %s3 = inlined_call_operand.vmem [shape: f32[1,512], index: 3, kind: input, shape index: {}]
  %s4 = inlined_call_operand.hbm [shape: f32[512,384], index: 4, kind: input, shape index: {}]
  %s5 = inlined_call_operand.vmem [shape: f32[1,384], index: 5, kind: input, shape index: {}]
  %s6 = inlined_call_operand.vmem [shape: f32[1,384], index: 6, kind: input, shape index: {}]
  %s7 = inlined_call_operand.vmem [shape: f32[8,128], index: 7, kind: output, shape index: {}]
  %s8 = sld [smem:[#allocation0]]
  $region42: #{actor_forward.1} parent=0
    _
  %s10 = ssub.s32 1, %s8
  %s11 = scalar_select 0, %s10, %s8
  %s12 = sshll.u32 %s0, 4
  %s13 = int_to_ptr.vmem [resolvable:$true] %s12
  %15 = dma.vmem_to_smem %s13, 16, [#allocation3], [#allocation2]
  %16 = dma.done [#allocation2], 16
  %17 = sfence
  $region1: #{actor_forward.1} parent=0
    #allocation4 [shape = 'u8[16384]{0}', space=vmem, size = 0x4000, scoped, tag = 'input window, operand 2, single buffered']
    #allocation5 [shape = 's32[1]{0}', space=sflag, size = 0x4, scoped, tag = 'scoped memory for actor_forward.1']
    #allocation6 [shape = 'u8[786432]{0}', space=vmem, size = 0xc0000, scoped, tag = 'input window, operand 4, single buffered']
    #allocation7 [shape = 's32[1]{0}', space=sflag, size = 0x4, scoped, tag = 'scoped memory for actor_forward.1']
    %18 = vsyncpa [#allocation5], 0
    %19 = vsyncpa [#allocation7], 0
    // Predicated region
    $region2: #{actor_forward.1} parent=1 // pred_check
      _
    $region3: #{actor_forward.1} parent=1 // pred_check_branch
      %21 = sbr.rel (0) target = $region5
    $region4: #{actor_forward.1} parent=1 // pred_region
      _
    $region5: #{actor_forward.1} parent=1 // pred_fallthru
      _
    // Predicated region
    $region6: #{actor_forward.1} parent=1 // pred_check
      _
    $region7: #{actor_forward.1} parent=1 // pred_check_branch
      %23 = sbr.rel (0) target = $region9
    $region8: #{actor_forward.1} parent=1 // pred_region
      %s25 = ssub.s32 512, 512
      %26 = vsyncadd [#allocation5], %s25
      %s28 = sshll.u32 [#allocation4], 4
      %s29 = int_to_ptr.vmem [resolvable:$true] %s28
      %31 = dma.hbm_to_vmem [thread:$0]  %s2, 512, %s29, [#allocation5]
    $region9: #{actor_forward.1} parent=1 // pred_fallthru
      _
    // Predicated region
    $region10: #{actor_forward.1} parent=1 // pred_check
      _
    $region11: #{actor_forward.1} parent=1 // pred_check_branch
      %33 = sbr.rel (0) target = $region13
    $region12: #{actor_forward.1} parent=1 // pred_region
      _
    $region13: #{actor_forward.1} parent=1 // pred_fallthru
      _
    // Predicated region
    $region14: #{actor_forward.1} parent=1 // pred_check
      _
    $region15: #{actor_forward.1} parent=1 // pred_check_branch
      %35 = sbr.rel (0) target = $region17
    $region16: #{actor_forward.1} parent=1 // pred_region
      %s37 = ssub.s32 24576, 24576
      %38 = vsyncadd [#allocation7], %s37
      %s39 = sshll.u32 [#allocation6], 4
      %s40 = int_to_ptr.vmem [resolvable:$true] %s39
      %45 = dma.hbm_to_vmem [thread:$0]  %s4, 24576, %s40, [#allocation7], 384, 384, 24
    $region17: #{actor_forward.1} parent=1 // pred_fallthru
      _
    // Predicated region
    $region18: #{actor_forward.1} parent=1 // pred_check
      _
    $region19: #{actor_forward.1} parent=1 // pred_check_branch
      %47 = sbr.rel (0) target = $region21
    $region20: #{actor_forward.1} parent=1 // pred_region
      _
    $region21: #{actor_forward.1} parent=1 // pred_fallthru
      _
    // Predicated region
    $region22: #{actor_forward.1} parent=1 // pred_check
      _
    $region23: #{actor_forward.1} parent=1 // pred_check_branch
      %49 = sbr.rel (0) target = $region25
    $region24: #{actor_forward.1} parent=1 // pred_region
      _
    $region25: #{actor_forward.1} parent=1 // pred_fallthru
      _
    // Predicated region
    $region26: #{actor_forward.1} parent=1 // pred_check
      _
    $region27: #{actor_forward.1} parent=1 // pred_check_branch
      %51 = sbr.rel (0) target = $region29
    $region28: #{actor_forward.1} parent=1 // pred_region
      %52 = dma.done [#allocation5], 512
    $region29: #{actor_forward.1} parent=1 // pred_fallthru
      _
    // Predicated region
    $region30: #{actor_forward.1} parent=1 // pred_check
      _
    $region31: #{actor_forward.1} parent=1 // pred_check_branch
      %54 = sbr.rel (0) target = $region33
    $region32: #{actor_forward.1} parent=1 // pred_region
      %55 = dma.done [#allocation7], 24576
    $region33: #{actor_forward.1} parent=1 // pred_fallthru
      _
    %v56 = vld [vmem:[%s1] sm:$0xff]
    %v57 = vld [vmem:[#allocation4] sm:$0xff]
    %v58 = vld [vmem:[#allocation4 + $0x8] sm:$0xff]
    %v59 = vld [vmem:[#allocation4 + $0x10] sm:$0xff]
    %v60 = vld [vmem:[#allocation4 + $0x18] sm:$0xff]
    %62 = vset.pattern.permute.xlu0 0
    %63 = vperm.xlu0 %62, %v56
    %v64 = vpop.permute.xlu0 %63
    %v66 = vlaneseq
    %v67 = vshrl.u32 %v66, 7
    %v68 = vsub.s32 0, %v67
    %v69 = vrot.slane %v57, %v68
    %v70 = vlaneseq
    %v71 = vshrl.u32 %v70, 7
    %v72 = vsub.s32 0, %v71
    %v73 = vrot.slane %v58, %v72
    %v74 = vlaneseq
    %v75 = vshrl.u32 %v74, 7
    %v76 = vsub.s32 0, %v75
    %v77 = vrot.slane %v59, %v76
    %v78 = vlaneseq
    %v79 = vshrl.u32 %v78, 7
    %v80 = vsub.s32 0, %v79
    %v81 = vrot.slane %v60, %v80
    %v82 = vmul.f32 %v64, %v69
    %v83 = vmul.f32 %v64, %v73
    %v84 = vmul.f32 %v64, %v77
    %v85 = vmul.f32 %v64, %v81
    %86 = vset.pattern.permute.xlu0 1
    %87 = vperm.xlu0 %86, %v56
    %v88 = vpop.permute.xlu0 %87
    %v90 = vlaneseq
    %v91 = vshrl.u32 %v90, 7
    %v92 = vsub.s32 1, %v91
    %v93 = vrot.slane %v57, %v92
    %v94 = vlaneseq
    %v95 = vshrl.u32 %v94, 7
    %v96 = vsub.s32 1, %v95
    %v97 = vrot.slane %v58, %v96
    %v98 = vlaneseq
    %v99 = vshrl.u32 %v98, 7
    %v100 = vsub.s32 1, %v99
    %v101 = vrot.slane %v59, %v100
    %v102 = vlaneseq
    %v103 = vshrl.u32 %v102, 7
    %v104 = vsub.s32 1, %v103
    %v105 = vrot.slane %v60, %v104
    %v106 = vmul.f32 %v88, %v93
    %v107 = vmul.f32 %v88, %v97
    %v108 = vmul.f32 %v88, %v101
    %v109 = vmul.f32 %v88, %v105
    %v110 = vadd.f32 %v82, %v106
    %v111 = vadd.f32 %v83, %v107
    %v112 = vadd.f32 %v84, %v108
    %v113 = vadd.f32 %v85, %v109
    %114 = vset.pattern.permute.xlu0 2
    %115 = vperm.xlu0 %114, %v56
    %v116 = vpop.permute.xlu0 %115
    %v118 = vlaneseq
    %v119 = vshrl.u32 %v118, 7
    %v120 = vsub.s32 2, %v119
    %v121 = vrot.slane %v57, %v120
    %v122 = vlaneseq
    %v123 = vshrl.u32 %v122, 7
    %v124 = vsub.s32 2, %v123
    %v125 = vrot.slane %v58, %v124
    %v126 = vlaneseq
    %v127 = vshrl.u32 %v126, 7
    %v128 = vsub.s32 2, %v127
    %v129 = vrot.slane %v59, %v128
    %v130 = vlaneseq
    %v131 = vshrl.u32 %v130, 7
    %v132 = vsub.s32 2, %v131
    %v133 = vrot.slane %v60, %v132
    %v134 = vmul.f32 %v116, %v121
    %v135 = vmul.f32 %v116, %v125
    %v136 = vmul.f32 %v116, %v129
    %v137 = vmul.f32 %v116, %v133
    %v138 = vadd.f32 %v110, %v134
    %v139 = vadd.f32 %v111, %v135
    %v140 = vadd.f32 %v112, %v136
    %v141 = vadd.f32 %v113, %v137
    %v142 = vld [vmem:[%s3] sm:$0xf]
    %v144 = vlaneseq
    %v145 = vshrl.u32 %v144, 7
    %v146 = vsub.s32 0, %v145
    %v147 = vrot.slane %v142, %v146
    %v148 = vlaneseq
    %v149 = vshrl.u32 %v148, 7
    %v150 = vsub.s32 1, %v149
    %v151 = vrot.slane %v142, %v150
    %v152 = vlaneseq
    %v153 = vshrl.u32 %v152, 7
    %v154 = vsub.s32 2, %v153
    %v155 = vrot.slane %v142, %v154
    %v156 = vlaneseq
    %v157 = vshrl.u32 %v156, 7
    %v158 = vsub.s32 3, %v157
    %v159 = vrot.slane %v142, %v158
    %v164 = vadd.f32 %v138, %v147
    %v165 = vadd.f32 %v139, %v151
    %v166 = vadd.f32 %v140, %v155
    %v167 = vadd.f32 %v141, %v159
    %v168 = vmax.f32 %v164, 0.0
    %v169 = vmax.f32 %v165, 0.0
    %v170 = vmax.f32 %v166, 0.0
    %v171 = vmax.f32 %v167, 0.0
    %v172 = vld [vmem:[#allocation6] sm:$0xff]
    %v173 = vld [vmem:[#allocation6 + $0x8] sm:$0xff]
    %v174 = vld [vmem:[#allocation6 + $0x10] sm:$0xff]
    %v175 = vld [vmem:[#allocation6 + $0x18] sm:$0xff]
    %v176 = vld [vmem:[#allocation6 + $0x20] sm:$0xff]
    %v177 = vld [vmem:[#allocation6 + $0x28] sm:$0xff]
    %v178 = vld [vmem:[#allocation6 + $0x30] sm:$0xff]
    %v179 = vld [vmem:[#allocation6 + $0x38] sm:$0xff]
    %v180 = vld [vmem:[#allocation6 + $0x40] sm:$0xff]
    %v181 = vld [vmem:[#allocation6 + $0x48] sm:$0xff]
    %v182 = vld [vmem:[#allocation6 + $0x50] sm:$0xff]
    %v183 = vld [vmem:[#allocation6 + $0x58] sm:$0xff]
    %v184 = vld [vmem:[#allocation6 + $0x60] sm:$0xff]
    %v185 = vld [vmem:[#allocation6 + $0x68] sm:$0xff]
    %v186 = vld [vmem:[#allocation6 + $0x70] sm:$0xff]
    %v187 = vld [vmem:[#allocation6 + $0x78] sm:$0xff]
    %v188 = vld [vmem:[#allocation6 + $0x80] sm:$0xff]
    %v189 = vld [vmem:[#allocation6 + $0x88] sm:$0xff]
    %v190 = vld [vmem:[#allocation6 + $0x90] sm:$0xff]
    %v191 = vld [vmem:[#allocation6 + $0x98] sm:$0xff]
    %v192 = vld [vmem:[#allocation6 + $0xa0] sm:$0xff]
    %v193 = vld [vmem:[#allocation6 + $0xa8] sm:$0xff]
    %v194 = vld [vmem:[#allocation6 + $0xb0] sm:$0xff]
    %v195 = vld [vmem:[#allocation6 + $0xb8] sm:$0xff]
    %v196 = vld [vmem:[#allocation6 + $0xc0] sm:$0xff]
    %v197 = vld [vmem:[#allocation6 + $0xc8] sm:$0xff]
    %v198 = vld [vmem:[#allocation6 + $0xd0] sm:$0xff]
    %v199 = vld [vmem:[#allocation6 + $0xd8] sm:$0xff]
    %v200 = vld [vmem:[#allocation6 + $0xe0] sm:$0xff]
    %v201 = vld [vmem:[#allocation6 + $0xe8] sm:$0xff]
    %v202 = vld [vmem:[#allocation6 + $0xf0] sm:$0xff]
    %v203 = vld [vmem:[#allocation6 + $0xf8] sm:$0xff]
    %v204 = vld [vmem:[#allocation6 + $0x100] sm:$0xff]
    %v205 = vld [vmem:[#allocation6 + $0x108] sm:$0xff]
    %v206 = vld [vmem:[#allocation6 + $0x110] sm:$0xff]
    %v207 = vld [vmem:[#allocation6 + $0x118] sm:$0xff]
    %v208 = vld [vmem:[#allocation6 + $0x120] sm:$0xff]
    %v209 = vld [vmem:[#allocation6 + $0x128] sm:$0xff]
    %v210 = vld [vmem:[#allocation6 + $0x130] sm:$0xff]
    %v211 = vld [vmem:[#allocation6 + $0x138] sm:$0xff]
    %v212 = vld [vmem:[#allocation6 + $0x140] sm:$0xff]
    %v213 = vld [vmem:[#allocation6 + $0x148] sm:$0xff]
    %v214 = vld [vmem:[#allocation6 + $0x150] sm:$0xff]
    %v215 = vld [vmem:[#allocation6 + $0x158] sm:$0xff]
    %v216 = vld [vmem:[#allocation6 + $0x160] sm:$0xff]
    %v217 = vld [vmem:[#allocation6 + $0x168] sm:$0xff]
    %v218 = vld [vmem:[#allocation6 + $0x170] sm:$0xff]
    %v219 = vld [vmem:[#allocation6 + $0x178] sm:$0xff]
    %v220 = vld [vmem:[#allocation6 + $0x180] sm:$0xff]
    %v221 = vld [vmem:[#allocation6 + $0x188] sm:$0xff]
    %v222 = vld [vmem:[#allocation6 + $0x190] sm:$0xff]
    %v223 = vld [vmem:[#allocation6 + $0x198] sm:$0xff]
    %v224 = vld [vmem:[#allocation6 + $0x1a0] sm:$0xff]
    %v225 = vld [vmem:[#allocation6 + $0x1a8] sm:$0xff]
    %v226 = vld [vmem:[#allocation6 + $0x1b0] sm:$0xff]
    %v227 = vld [vmem:[#allocation6 + $0x1b8] sm:$0xff]
    %v228 = vld [vmem:[#allocation6 + $0x1c0] sm:$0xff]
    %v229 = vld [vmem:[#allocation6 + $0x1c8] sm:$0xff]
    %v230 = vld [vmem:[#allocation6 + $0x1d0] sm:$0xff]
    %v231 = vld [vmem:[#allocation6 + $0x1d8] sm:$0xff]
    %v232 = vld [vmem:[#allocation6 + $0x1e0] sm:$0xff]
    %v233 = vld [vmem:[#allocation6 + $0x1e8] sm:$0xff]
    %v234 = vld [vmem:[#allocation6 + $0x1f0] sm:$0xff]
    %v235 = vld [vmem:[#allocation6 + $0x1f8] sm:$0xff]
    %v236 = vld [vmem:[#allocation6 + $0x200] sm:$0xff]
    %v237 = vld [vmem:[#allocation6 + $0x208] sm:$0xff]
    %v238 = vld [vmem:[#allocation6 + $0x210] sm:$0xff]
    %v239 = vld [vmem:[#allocation6 + $0x218] sm:$0xff]
    %v240 = vld [vmem:[#allocation6 + $0x220] sm:$0xff]
    %v241 = vld [vmem:[#allocation6 + $0x228] sm:$0xff]
    %v242 = vld [vmem:[#allocation6 + $0x230] sm:$0xff]
    %v243 = vld [vmem:[#allocation6 + $0x238] sm:$0xff]
    %v244 = vld [vmem:[#allocation6 + $0x240] sm:$0xff]
    %v245 = vld [vmem:[#allocation6 + $0x248] sm:$0xff]
    %v246 = vld [vmem:[#allocation6 + $0x250] sm:$0xff]
    %v247 = vld [vmem:[#allocation6 + $0x258] sm:$0xff]
    %v248 = vld [vmem:[#allocation6 + $0x260] sm:$0xff]
    %v249 = vld [vmem:[#allocation6 + $0x268] sm:$0xff]
    %v250 = vld [vmem:[#allocation6 + $0x270] sm:$0xff]
    %v251 = vld [vmem:[#allocation6 + $0x278] sm:$0xff]
    %v252 = vld [vmem:[#allocation6 + $0x280] sm:$0xff]
    %v253 = vld [vmem:[#allocation6 + $0x288] sm:$0xff]
    %v254 = vld [vmem:[#allocation6 + $0x290] sm:$0xff]
    %v255 = vld [vmem:[#allocation6 + $0x298] sm:$0xff]
    %v256 = vld [vmem:[#allocation6 + $0x2a0] sm:$0xff]
    %v257 = vld [vmem:[#allocation6 + $0x2a8] sm:$0xff]
    %v258 = vld [vmem:[#allocation6 + $0x2b0] sm:$0xff]
    %v259 = vld [vmem:[#allocation6 + $0x2b8] sm:$0xff]
    %v260 = vld [vmem:[#allocation6 + $0x2c0] sm:$0xff]
    %v261 = vld [vmem:[#allocation6 + $0x2c8] sm:$0xff]
    %v262 = vld [vmem:[#allocation6 + $0x2d0] sm:$0xff]
    %v263 = vld [vmem:[#allocation6 + $0x2d8] sm:$0xff]
    %v264 = vld [vmem:[#allocation6 + $0x2e0] sm:$0xff]
    %v265 = vld [vmem:[#allocation6 + $0x2e8] sm:$0xff]
    %v266 = vld [vmem:[#allocation6 + $0x2f0] sm:$0xff]
    %v267 = vld [vmem:[#allocation6 + $0x2f8] sm:$0xff]
    %v268 = vld [vmem:[#allocation6 + $0x300] sm:$0xff]
    %v269 = vld [vmem:[#allocation6 + $0x308] sm:$0xff]
    %v270 = vld [vmem:[#allocation6 + $0x310] sm:$0xff]
    %v271 = vld [vmem:[#allocation6 + $0x318] sm:$0xff]
    %v272 = vld [vmem:[#allocation6 + $0x320] sm:$0xff]
    %v273 = vld [vmem:[#allocation6 + $0x328] sm:$0xff]
    %v274 = vld [vmem:[#allocation6 + $0x330] sm:$0xff]
    %v275 = vld [vmem:[#allocation6 + $0x338] sm:$0xff]
    %v276 = vld [vmem:[#allocation6 + $0x340] sm:$0xff]
    %v277 = vld [vmem:[#allocation6 + $0x348] sm:$0xff]
    %v278 = vld [vmem:[#allocation6 + $0x350] sm:$0xff]
    %v279 = vld [vmem:[#allocation6 + $0x358] sm:$0xff]
    %v280 = vld [vmem:[#allocation6 + $0x360] sm:$0xff]
    %v281 = vld [vmem:[#allocation6 + $0x368] sm:$0xff]
    %v282 = vld [vmem:[#allocation6 + $0x370] sm:$0xff]
    %v283 = vld [vmem:[#allocation6 + $0x378] sm:$0xff]
    %v284 = vld [vmem:[#allocation6 + $0x380] sm:$0xff]
    %v285 = vld [vmem:[#allocation6 + $0x388] sm:$0xff]
    %v286 = vld [vmem:[#allocation6 + $0x390] sm:$0xff]
    %v287 = vld [vmem:[#allocation6 + $0x398] sm:$0xff]
    %v288 = vld [vmem:[#allocation6 + $0x3a0] sm:$0xff]
    %v289 = vld [vmem:[#allocation6 + $0x3a8] sm:$0xff]
    %v290 = vld [vmem:[#allocation6 + $0x3b0] sm:$0xff]
    %v291 = vld [vmem:[#allocation6 + $0x3b8] sm:$0xff]
    %v292 = vld [vmem:[#allocation6 + $0x3c0] sm:$0xff]
    %v293 = vld [vmem:[#allocation6 + $0x3c8] sm:$0xff]
    %v294 = vld [vmem:[#allocation6 + $0x3d0] sm:$0xff]
    %v295 = vld [vmem:[#allocation6 + $0x3d8] sm:$0xff]
    %v296 = vld [vmem:[#allocation6 + $0x3e0] sm:$0xff]
    %v297 = vld [vmem:[#allocation6 + $0x3e8] sm:$0xff]
    %v298 = vld [vmem:[#allocation6 + $0x3f0] sm:$0xff]
    %v299 = vld [vmem:[#allocation6 + $0x3f8] sm:$0xff]
    %v300 = vld [vmem:[#allocation6 + $0x400] sm:$0xff]
    %v301 = vld [vmem:[#allocation6 + $0x408] sm:$0xff]
    %v302 = vld [vmem:[#allocation6 + $0x410] sm:$0xff]
    %v303 = vld [vmem:[#allocation6 + $0x418] sm:$0xff]
    %v304 = vld [vmem:[#allocation6 + $0x420] sm:$0xff]
    %v305 = vld [vmem:[#allocation6 + $0x428] sm:$0xff]
    %v306 = vld [vmem:[#allocation6 + $0x430] sm:$0xff]
    %v307 = vld [vmem:[#allocation6 + $0x438] sm:$0xff]
    %v308 = vld [vmem:[#allocation6 + $0x440] sm:$0xff]
    %v309 = vld [vmem:[#allocation6 + $0x448] sm:$0xff]
    %v310 = vld [vmem:[#allocation6 + $0x450] sm:$0xff]
    %v311 = vld [vmem:[#allocation6 + $0x458] sm:$0xff]
    %v312 = vld [vmem:[#allocation6 + $0x460] sm:$0xff]
    %v313 = vld [vmem:[#allocation6 + $0x468] sm:$0xff]
    %v314 = vld [vmem:[#allocation6 + $0x470] sm:$0xff]
    %v315 = vld [vmem:[#allocation6 + $0x478] sm:$0xff]
    %v316 = vld [vmem:[#allocation6 + $0x480] sm:$0xff]
    %v317 = vld [vmem:[#allocation6 + $0x488] sm:$0xff]
    %v318 = vld [vmem:[#allocation6 + $0x490] sm:$0xff]
    %v319 = vld [vmem:[#allocation6 + $0x498] sm:$0xff]
    %v320 = vld [vmem:[#allocation6 + $0x4a0] sm:$0xff]
    %v321 = vld [vmem:[#allocation6 + $0x4a8] sm:$0xff]
    %v322 = vld [vmem:[#allocation6 + $0x4b0] sm:$0xff]
    %v323 = vld [vmem:[#allocation6 + $0x4b8] sm:$0xff]
    %v324 = vld [vmem:[#allocation6 + $0x4c0] sm:$0xff]
    %v325 = vld [vmem:[#allocation6 + $0x4c8] sm:$0xff]
    %v326 = vld [vmem:[#allocation6 + $0x4d0] sm:$0xff]
    %v327 = vld [vmem:[#allocation6 + $0x4d8] sm:$0xff]
    %v328 = vld [vmem:[#allocation6 + $0x4e0] sm:$0xff]
    %v329 = vld [vmem:[#allocation6 + $0x4e8] sm:$0xff]
    %v330 = vld [vmem:[#allocation6 + $0x4f0] sm:$0xff]
    %v331 = vld [vmem:[#allocation6 + $0x4f8] sm:$0xff]
    %v332 = vld [vmem:[#allocation6 + $0x500] sm:$0xff]
    %v333 = vld [vmem:[#allocation6 + $0x508] sm:$0xff]
    %v334 = vld [vmem:[#allocation6 + $0x510] sm:$0xff]
    %v335 = vld [vmem:[#allocation6 + $0x518] sm:$0xff]
    %v336 = vld [vmem:[#allocation6 + $0x520] sm:$0xff]
    %v337 = vld [vmem:[#allocation6 + $0x528] sm:$0xff]
    %v338 = vld [vmem:[#allocation6 + $0x530] sm:$0xff]
    %v339 = vld [vmem:[#allocation6 + $0x538] sm:$0xff]
    %v340 = vld [vmem:[#allocation6 + $0x540] sm:$0xff]
    %v341 = vld [vmem:[#allocation6 + $0x548] sm:$0xff]
    %v342 = vld [vmem:[#allocation6 + $0x550] sm:$0xff]
    %v343 = vld [vmem:[#allocation6 + $0x558] sm:$0xff]
    %v344 = vld [vmem:[#allocation6 + $0x560] sm:$0xff]
    %v345 = vld [vmem:[#allocation6 + $0x568] sm:$0xff]
    %v346 = vld [vmem:[#allocation6 + $0x570] sm:$0xff]
    %v347 = vld [vmem:[#allocation6 + $0x578] sm:$0xff]
    %v348 = vld [vmem:[#allocation6 + $0x580] sm:$0xff]
    %v349 = vld [vmem:[#allocation6 + $0x588] sm:$0xff]
    %v350 = vld [vmem:[#allocation6 + $0x590] sm:$0xff]
    %v351 = vld [vmem:[#allocation6 + $0x598] sm:$0xff]
    %v352 = vld [vmem:[#allocation6 + $0x5a0] sm:$0xff]
    %v353 = vld [vmem:[#allocation6 + $0x5a8] sm:$0xff]
    %v354 = vld [vmem:[#allocation6 + $0x5b0] sm:$0xff]
    %v355 = vld [vmem:[#allocation6 + $0x5b8] sm:$0xff]
    %v356 = vld [vmem:[#allocation6 + $0x5c0] sm:$0xff]
    %v357 = vld [vmem:[#allocation6 + $0x5c8] sm:$0xff]
    %v358 = vld [vmem:[#allocation6 + $0x5d0] sm:$0xff]
    %v359 = vld [vmem:[#allocation6 + $0x5d8] sm:$0xff]
    %v360 = vld [vmem:[#allocation6 + $0x5e0] sm:$0xff]
    %v361 = vld [vmem:[#allocation6 + $0x5e8] sm:$0xff]
    %v362 = vld [vmem:[#allocation6 + $0x5f0] sm:$0xff]
    %v363 = vld [vmem:[#allocation6 + $0x5f8] sm:$0xff]
    %v364 = vld [vmem:[%s5] sm:$0x7]
    %v366 = vlaneseq
    %v367 = vshrl.u32 %v366, 7
    %v368 = vsub.s32 0, %v367
    %v369 = vrot.slane %v364, %v368
    %v370 = vlaneseq
    %v371 = vshrl.u32 %v370, 7
    %v372 = vsub.s32 1, %v371
    %v373 = vrot.slane %v364, %v372
    %v374 = vlaneseq
    %v375 = vshrl.u32 %v374, 7
    %v376 = vsub.s32 2, %v375
    %v377 = vrot.slane %v364, %v376
    %381 = vmatprep.subr.mxu0 %v218
    %382 = vmatpush1.msra.mxu0 %v217
    %383 = vmatprep.subr.mxu0 %v215
    %384 = vmatpush1.msra.mxu0 %v214
    %385 = vmatprep.subr.mxu0 %v212
    %386 = vmatpush1.msra.mxu0 %v211
    %387 = vmatprep.subr.mxu0 %v209
    %388 = vmatpush1.msra.mxu0 %v208
    %389 = vmatprep.subr.mxu0 %v206
    %390 = vmatpush1.msra.mxu0 %v205
    %391 = vmatprep.subr.mxu0 %v203
    %392 = vmatpush1.msra.mxu0 %v202
    %393 = vmatprep.subr.mxu0 %v200
    %394 = vmatpush1.msra.mxu0 %v199
    %395 = vmatprep.subr.mxu0 %v197
    %396 = vmatpush1.msra.mxu0 %v196
    %397 = vmatprep.subr.mxu0 %v194
    %398 = vmatpush1.msra.mxu0 %v193
    %399 = vmatprep.subr.mxu0 %v191
    %400 = vmatpush1.msra.mxu0 %v190
    %401 = vmatprep.subr.mxu0 %v188
    %402 = vmatpush1.msra.mxu0 %v187
    %403 = vmatprep.subr.mxu0 %v185
    %404 = vmatpush1.msra.mxu0 %v184
    %405 = vmatprep.subr.mxu0 %v182
    %406 = vmatpush1.msra.mxu0 %v181
    %407 = vmatprep.subr.mxu0 %v179
    %408 = vmatpush1.msra.mxu0 %v178
    %409 = vmatprep.subr.mxu0 %v176
    %410 = vmatpush1.msra.mxu0 %v175
    %411 = vmatprep.subr.mxu0 %v173
    %412 = vmatpush1.msra.mxu0 %v172
    %413 = vmatprep.subr.mxu0 %v266
    %414 = vmatpush2.msra.mxu0 %v265
    %415 = vmatprep.subr.mxu0 %v263
    %416 = vmatpush2.msra.mxu0 %v262
    %417 = vmatprep.subr.mxu0 %v260
    %418 = vmatpush2.msra.mxu0 %v259
    %419 = vmatprep.subr.mxu0 %v257
    %420 = vmatpush2.msra.mxu0 %v256
    %421 = vmatprep.subr.mxu0 %v254
    %422 = vmatpush2.msra.mxu0 %v253
    %423 = vmatprep.subr.mxu0 %v251
    %424 = vmatpush2.msra.mxu0 %v250
    %425 = vmatprep.subr.mxu0 %v248
    %426 = vmatpush2.msra.mxu0 %v247
    %427 = vmatprep.subr.mxu0 %v245
    %428 = vmatpush2.msra.mxu0 %v244
    %429 = vmatprep.subr.mxu0 %v242
    %430 = vmatpush2.msra.mxu0 %v241
    %431 = vmatprep.subr.mxu0 %v239
    %432 = vmatpush2.msra.mxu0 %v238
    %433 = vmatprep.subr.mxu0 %v236
    %434 = vmatpush2.msra.mxu0 %v235
    %435 = vmatprep.subr.mxu0 %v233
    %436 = vmatpush2.msra.mxu0 %v232
    %437 = vmatprep.subr.mxu0 %v230
    %438 = vmatpush2.msra.mxu0 %v229
    %439 = vmatprep.subr.mxu0 %v227
    %440 = vmatpush2.msra.mxu0 %v226
    %441 = vmatprep.subr.mxu0 %v224
    %442 = vmatpush2.msra.mxu0 %v223
    %443 = vmatprep.subr.mxu0 %v221
    %444 = vmatpush2.msra.mxu0 %v220
    %445 = vmatprep.mubr.f32.mxu0 %v169
    %446 = vmatmul.mubr.f32.gmra.mxu0 %v168
    %v447 = vpop.f32.mrf.mxu0
    %v448 = vadd.f32 %v369, %v447
    %v449 = vpop.f32.mrf.mxu0
    %v450 = vadd.f32 %v373, %v449
    %451 = vdwg.mxu0
    %452 = vmatprep.subr.mxu0 %v314
    %453 = vmatpush1.msra.mxu0 %v313
    %454 = vmatprep.subr.mxu0 %v311
    %455 = vmatpush1.msra.mxu0 %v310
    %456 = vmatprep.subr.mxu0 %v308
    %457 = vmatpush1.msra.mxu0 %v307
    %458 = vmatprep.subr.mxu0 %v305
    %459 = vmatpush1.msra.mxu0 %v304
    %460 = vmatprep.subr.mxu0 %v302
    %461 = vmatpush1.msra.mxu0 %v301
    %462 = vmatprep.subr.mxu0 %v299
    %463 = vmatpush1.msra.mxu0 %v298
    %464 = vmatprep.subr.mxu0 %v296
    %465 = vmatpush1.msra.mxu0 %v295
    %466 = vmatprep.subr.mxu0 %v293
    %467 = vmatpush1.msra.mxu0 %v292
    %468 = vmatprep.subr.mxu0 %v290
    %469 = vmatpush1.msra.mxu0 %v289
    %470 = vmatprep.subr.mxu0 %v287
    %471 = vmatpush1.msra.mxu0 %v286
    %472 = vmatprep.subr.mxu0 %v284
    %473 = vmatpush1.msra.mxu0 %v283
    %474 = vmatprep.subr.mxu0 %v281
    %475 = vmatpush1.msra.mxu0 %v280
    %476 = vmatprep.subr.mxu0 %v278
    %477 = vmatpush1.msra.mxu0 %v277
    %478 = vmatprep.subr.mxu0 %v275
    %479 = vmatpush1.msra.mxu0 %v274
    %480 = vmatprep.subr.mxu0 %v272
    %481 = vmatpush1.msra.mxu0 %v271
    %482 = vmatprep.subr.mxu0 %v269
    %483 = vmatpush1.msra.mxu0 %v268
    %484 = vmatprep.subr.mxu0 %v362
    %485 = vmatpush2.msra.mxu0 %v361
    %486 = vmatprep.subr.mxu0 %v359
    %487 = vmatpush2.msra.mxu0 %v358
    %488 = vmatprep.subr.mxu0 %v356
    %489 = vmatpush2.msra.mxu0 %v355
    %490 = vmatprep.subr.mxu0 %v353
    %491 = vmatpush2.msra.mxu0 %v352
    %492 = vmatprep.subr.mxu0 %v350
    %493 = vmatpush2.msra.mxu0 %v349
    %494 = vmatprep.subr.mxu0 %v347
    %495 = vmatpush2.msra.mxu0 %v346
    %496 = vmatprep.subr.mxu0 %v344
    %497 = vmatpush2.msra.mxu0 %v343
    %498 = vmatprep.subr.mxu0 %v341
    %499 = vmatpush2.msra.mxu0 %v340
    %500 = vmatprep.subr.mxu0 %v338
    %501 = vmatpush2.msra.mxu0 %v337
    %502 = vmatprep.subr.mxu0 %v335
    %503 = vmatpush2.msra.mxu0 %v334
    %504 = vmatprep.subr.mxu0 %v332
    %505 = vmatpush2.msra.mxu0 %v331
    %506 = vmatprep.subr.mxu0 %v329
    %507 = vmatpush2.msra.mxu0 %v328
    %508 = vmatprep.subr.mxu0 %v326
    %509 = vmatpush2.msra.mxu0 %v325
    %510 = vmatprep.subr.mxu0 %v323
    %511 = vmatpush2.msra.mxu0 %v322
    %512 = vmatprep.subr.mxu0 %v320
    %513 = vmatpush2.msra.mxu0 %v319
    %514 = vmatprep.subr.mxu0 %v317
    %515 = vmatpush2.msra.mxu0 %v316
    %516 = vmatprep.mubr.f32.mxu0 %v171
    %517 = vmatmul.mubr.f32.gmra.mxu0 %v170
    %v518 = vpop.f32.mrf.mxu0
    %v519 = vadd.f32 %v448, %v518
    %v520 = vpop.f32.mrf.mxu0
    %v521 = vadd.f32 %v450, %v520
    %522 = vdwg.mxu0
    %523 = vmatprep.subr.mxu0 0.0
    %524 = vmatpush1.msra.mxu0 %v219
    %525 = vmatprep.subr.mxu0 0.0
    %526 = vmatpush1.msra.mxu0 %v216
    %527 = vmatprep.subr.mxu0 0.0
    %528 = vmatpush1.msra.mxu0 %v213
    %529 = vmatprep.subr.mxu0 0.0
    %530 = vmatpush1.msra.mxu0 %v210
    %531 = vmatprep.subr.mxu0 0.0
    %532 = vmatpush1.msra.mxu0 %v207
    %533 = vmatprep.subr.mxu0 0.0
    %534 = vmatpush1.msra.mxu0 %v204
    %535 = vmatprep.subr.mxu0 0.0
    %536 = vmatpush1.msra.mxu0 %v201
    %537 = vmatprep.subr.mxu0 0.0
    %538 = vmatpush1.msra.mxu0 %v198
    %539 = vmatprep.subr.mxu0 0.0
    %540 = vmatpush1.msra.mxu0 %v195
    %541 = vmatprep.subr.mxu0 0.0
    %542 = vmatpush1.msra.mxu0 %v192
    %543 = vmatprep.subr.mxu0 0.0
    %544 = vmatpush1.msra.mxu0 %v189
    %545 = vmatprep.subr.mxu0 0.0
    %546 = vmatpush1.msra.mxu0 %v186
    %547 = vmatprep.subr.mxu0 0.0
    %548 = vmatpush1.msra.mxu0 %v183
    %549 = vmatprep.subr.mxu0 0.0
    %550 = vmatpush1.msra.mxu0 %v180
    %551 = vmatprep.subr.mxu0 0.0
    %552 = vmatpush1.msra.mxu0 %v177
    %553 = vmatprep.subr.mxu0 0.0
    %554 = vmatpush1.msra.mxu0 %v174
    %555 = vmatprep.subr.mxu0 0.0
    %556 = vmatpush2.msra.mxu0 %v267
    %557 = vmatprep.subr.mxu0 0.0
    %558 = vmatpush2.msra.mxu0 %v264
    %559 = vmatprep.subr.mxu0 0.0
    %560 = vmatpush2.msra.mxu0 %v261
    %561 = vmatprep.subr.mxu0 0.0
    %562 = vmatpush2.msra.mxu0 %v258
    %563 = vmatprep.subr.mxu0 0.0
    %564 = vmatpush2.msra.mxu0 %v255
    %565 = vmatprep.subr.mxu0 0.0
    %566 = vmatpush2.msra.mxu0 %v252
    %567 = vmatprep.subr.mxu0 0.0
    %568 = vmatpush2.msra.mxu0 %v249
    %569 = vmatprep.subr.mxu0 0.0
    %570 = vmatpush2.msra.mxu0 %v246
    %571 = vmatprep.subr.mxu0 0.0
    %572 = vmatpush2.msra.mxu0 %v243
    %573 = vmatprep.subr.mxu0 0.0
    %574 = vmatpush2.msra.mxu0 %v240
    %575 = vmatprep.subr.mxu0 0.0
    %576 = vmatpush2.msra.mxu0 %v237
    %577 = vmatprep.subr.mxu0 0.0
    %578 = vmatpush2.msra.mxu0 %v234
    %579 = vmatprep.subr.mxu0 0.0
    %580 = vmatpush2.msra.mxu0 %v231
    %581 = vmatprep.subr.mxu0 0.0
    %582 = vmatpush2.msra.mxu0 %v228
    %583 = vmatprep.subr.mxu0 0.0
    %584 = vmatpush2.msra.mxu0 %v225
    %585 = vmatprep.subr.mxu0 0.0
    %586 = vmatpush2.msra.mxu0 %v222
    %587 = vmatprep.mubr.f32.mxu0 %v169
    %588 = vmatmul.mubr.f32.gmra.mxu0 %v168
    %v589 = vpop.f32.mrf.mxu0
    %v590 = vadd.f32 %v377, %v589
    %v591 = vpop.f32.mrf.mxu0
    %592 = vdwg.mxu0
    %593 = vmatprep.subr.mxu0 0.0
    %594 = vmatpush1.msra.mxu0 %v315
    %595 = vmatprep.subr.mxu0 0.0
    %596 = vmatpush1.msra.mxu0 %v312
    %597 = vmatprep.subr.mxu0 0.0
    %598 = vmatpush1.msra.mxu0 %v309
    %599 = vmatprep.subr.mxu0 0.0
    %600 = vmatpush1.msra.mxu0 %v306
    %601 = vmatprep.subr.mxu0 0.0
    %602 = vmatpush1.msra.mxu0 %v303
    %603 = vmatprep.subr.mxu0 0.0
    %604 = vmatpush1.msra.mxu0 %v300
    %605 = vmatprep.subr.mxu0 0.0
    %606 = vmatpush1.msra.mxu0 %v297
    %607 = vmatprep.subr.mxu0 0.0
    %608 = vmatpush1.msra.mxu0 %v294
    %609 = vmatprep.subr.mxu0 0.0
    %610 = vmatpush1.msra.mxu0 %v291
    %611 = vmatprep.subr.mxu0 0.0
    %612 = vmatpush1.msra.mxu0 %v288
    %613 = vmatprep.subr.mxu0 0.0
    %614 = vmatpush1.msra.mxu0 %v285
    %615 = vmatprep.subr.mxu0 0.0
    %616 = vmatpush1.msra.mxu0 %v282
    %617 = vmatprep.subr.mxu0 0.0
    %618 = vmatpush1.msra.mxu0 %v279
    %619 = vmatprep.subr.mxu0 0.0
    %620 = vmatpush1.msra.mxu0 %v276
    %621 = vmatprep.subr.mxu0 0.0
    %622 = vmatpush1.msra.mxu0 %v273
    %623 = vmatprep.subr.mxu0 0.0
    %624 = vmatpush1.msra.mxu0 %v270
    %625 = vmatprep.subr.mxu0 0.0
    %626 = vmatpush2.msra.mxu0 %v363
    %627 = vmatprep.subr.mxu0 0.0
    %628 = vmatpush2.msra.mxu0 %v360
    %629 = vmatprep.subr.mxu0 0.0
    %630 = vmatpush2.msra.mxu0 %v357
    %631 = vmatprep.subr.mxu0 0.0
    %632 = vmatpush2.msra.mxu0 %v354
    %633 = vmatprep.subr.mxu0 0.0
    %634 = vmatpush2.msra.mxu0 %v351
    %635 = vmatprep.subr.mxu0 0.0
    %636 = vmatpush2.msra.mxu0 %v348
    %637 = vmatprep.subr.mxu0 0.0
    %638 = vmatpush2.msra.mxu0 %v345
    %639 = vmatprep.subr.mxu0 0.0
    %640 = vmatpush2.msra.mxu0 %v342
    %641 = vmatprep.subr.mxu0 0.0
    %642 = vmatpush2.msra.mxu0 %v339
    %643 = vmatprep.subr.mxu0 0.0
    %644 = vmatpush2.msra.mxu0 %v336
    %645 = vmatprep.subr.mxu0 0.0
    %646 = vmatpush2.msra.mxu0 %v333
    %647 = vmatprep.subr.mxu0 0.0
    %648 = vmatpush2.msra.mxu0 %v330
    %649 = vmatprep.subr.mxu0 0.0
    %650 = vmatpush2.msra.mxu0 %v327
    %651 = vmatprep.subr.mxu0 0.0
    %652 = vmatpush2.msra.mxu0 %v324
    %653 = vmatprep.subr.mxu0 0.0
    %654 = vmatpush2.msra.mxu0 %v321
    %655 = vmatprep.subr.mxu0 0.0
    %656 = vmatpush2.msra.mxu0 %v318
    %657 = vmatprep.mubr.f32.mxu0 %v171
    %658 = vmatmul.mubr.f32.gmra.mxu0 %v170
    %v659 = vpop.f32.mrf.mxu0
    %v660 = vadd.f32 %v590, %v659
    %v661 = vpop.f32.mrf.mxu0
    %662 = vdwg.mxu0
    %v663 = vmax.f32 %v519, 0.0
    %v664 = vmax.f32 %v521, 0.0
    %v665 = vmax.f32 %v660, 0.0
    %s666 = sld [smem:[#allocation3]]
    %s667 = sld [smem:[#allocation3 + $0x1]]
    %v668 = vld [vmem:[%s6] sm:$0x7]
    %v670 = vlaneseq
    %v671 = vshrl.u32 %v670, 7
    %v672 = vsub.s32 0, %v671
    %v673 = vrot.slane %v668, %v672
    %v674 = vlaneseq
    %v675 = vshrl.u32 %v674, 7
    %v676 = vsub.s32 1, %v675
    %v677 = vrot.slane %v668, %v676
    %v678 = vlaneseq
    %v679 = vshrl.u32 %v678, 7
    %v680 = vsub.s32 2, %v679
    %v681 = vrot.slane %v668, %v680
    %v685 = vmul.f32 %v663, %v673
    %v686 = vmul.f32 %v664, %v677
    %v687 = vmul.f32 %v665, %v681
    %v688 = vadd.f32 %v685, %v686
    %v689 = vadd.f32 %v688, %v687
    %690 = vadd.xlane.f32.xlu0 %v689
    %v691 = vpop.xlane.xlu0 %690
    %v692 = vstv %s666
    %v693 = vadd.f32 %v691, %v692
    %v694 = vtanh.pop %v693
    %v695 = vstv %s667
    %v696 = vadd.f32 %v694, %v695
    %v697 = vmax.f32 %v696, -2.0
    %v698 = vmin.f32 %v697, 2.0
    %v699 = vmul.f32 %v698, 2.0
    %700 = vst [vmem:[%s7] sm:$0xff] %v699
    // Predicated region
    $region34: #{actor_forward.1} parent=1 // pred_check
      _
    $region35: #{actor_forward.1} parent=1 // pred_check_branch
      %702 = sbr.rel (0) target = $region37
    $region36: #{actor_forward.1} parent=1 // pred_region
      _
    $region37: #{actor_forward.1} parent=1 // pred_fallthru
      _
    // Predicated region
    $region38: #{actor_forward.1} parent=1 // pred_check
      _
    $region39: #{actor_forward.1} parent=1 // pred_check_branch
      %704 = sbr.rel (0) target = $region41
    $region40: #{actor_forward.1} parent=1 // pred_region
      _
    $region41: #{actor_forward.1} parent=1 // pred_fallthru
      _
    %705 = vsyncpa [#allocation5], 1
    %706 = vsyncpa [#allocation7], 1

</llo_original>
